<compile_context>
chip_gen: v5e
topology: v5e:2x2
jax: 0.10.0
libtpu: 0.0.40
codegen_flags: <defaults>
</compile_context>

<pallas_src>
import math

import jax
import jax.numpy as jnp
from jax import lax
from jax.experimental import pallas as pl
from jax.experimental.pallas import tpu as pltpu

_LANE = 128
_SUBLANE = 8
_UNROLL_MAX_AX = 16        # fully unroll the k scan up to this many source rows
_K_UNROLL = 8              # fori_loop unroll factor for longer k scans
_STRIP_VREGS = 16          # target vregs for (acc + idx) per in-kernel strip
_LANE_GATHER_MAX_AX = 32   # last-axis (lane) gather path: max source extent


def _cdiv(a, b):
    return -(-a // b)


def _round_up(n, m):
    return _cdiv(n, m) * m


def _tpu_budgets():
    """(per-grid-step block budget, scoped VMEM limit), sized per generation."""
    vmem_cap = None
    try:
        info = pltpu.get_tpu_info()
        vmem_cap = getattr(info, "vmem_capacity_bytes", None)
    except Exception:
        vmem_cap = None
    if vmem_cap is None:
        vmem_cap = 64 * 1024 * 1024                    # conservative: v7x size
    if vmem_cap >= 128 * 1024 * 1024:                  # v5e / v6e
        return 16 * 1024 * 1024, 64 * 1024 * 1024
    return 10 * 1024 * 1024, 44 * 1024 * 1024          # v7x (64 MiB physical)


# --------------------------------------------------------------------------
# Gather along the sublane (middle) axis of (rows, *, lanes) blocks.
# --------------------------------------------------------------------------
def _make_axis_kernel(a_x_total):
    """x_ref: (rows, tk, tile_i); idx_ref/o_ref: (rows, a_idx, tile_i).

    The output block is resident across the (innermost, "arbitrary") source
    axis of the grid and carries the partial result between k tiles.
    """

    def kernel(x_ref, idx_ref, o_ref):
        rows, tk, tile_i = x_ref.shape
        a_idx = idx_ref.shape[1]
        base_k = pl.program_id(2) * tk          # global offset of this k tile

        # Lane-strip width so acc + idx stay vreg-resident across the k scan.
        a_vregs = max(1, _cdiv(a_idx, _SUBLANE))
        lane_strip = min(tile_i, _LANE * max(1, _STRIP_VREGS // (2 * a_vregs)))
        n_full = tile_i // lane_strip
        rem = tile_i - n_full * lane_strip

        def scan_strip(r, lane0, width):
            idx = idx_ref[pl.ds(r, 1), :, lane0:lane0 + width].astype(jnp.int32)
            idx = jnp.clip(idx, 0, a_x_total - 1)
            # Resident output block carries the partial result across k tiles;
            # its initial contents are arbitrary, but every element is
            # overwritten exactly once (its clamped index matches exactly one
            # global k), so no explicit init pass is needed.
            acc = o_ref[pl.ds(r, 1), :, lane0:lane0 + width]

            def select(j, acc):
                row = x_ref[pl.ds(r, 1), pl.ds(j, 1), lane0:lane0 + width]
                return jnp.where(idx == base_k + j, row, acc)

            if tk <= _UNROLL_MAX_AX:
                for j in range(tk):
                    acc = select(j, acc)
            else:
                acc = lax.fori_loop(0, tk, select, acc, unroll=_K_UNROLL)
            o_ref[pl.ds(r, 1), :, lane0:lane0 + width] = acc

        @pl.loop(0, rows)
        def _(r):
            for s in range(n_full):
                scan_strip(r, s * lane_strip, lane_strip)
            if rem:
                scan_strip(r, n_full * lane_strip, rem)

    return kernel


def _choose_axis_tiles(outer, a_x, a_idx, inner, x_bytes, idx_bytes, budget):
    a_idx_p = _round_up(a_idx, _SUBLANE)
    # Tile the source axis only if a minimal (1 row, 128 lane) x block would
    # otherwise eat more than half the per-step budget.
    max_tk = max(_SUBLANE, (budget // 2) // (x_bytes * _LANE))
    if a_x <= max_tk:
        tk = a_x
    else:
        tk = max(_SUBLANE, (max_tk // _SUBLANE) * _SUBLANE)
    # Bytes one (row, lane) column contributes, sublane padding included.
    col_bytes = _round_up(tk, _SUBLANE) * x_bytes + a_idx_p * (idx_bytes + x_bytes)
    max_cols = max(_LANE, budget // col_bytes)
    tile_i = inner if inner <= max_cols else max(_LANE, (max_cols // _LANE) * _LANE)
    rows = int(max(1, min(outer, budget // (col_bytes * tile_i))))
    # Guarantee >= 2 blocks on a "parallel" grid axis (v7x has 2 TensorCores).
    if _cdiv(outer, rows) * _cdiv(inner, tile_i) < 2:
        if outer >= 2:
            rows = max(1, min(rows, outer // 2))
        elif inner > _LANE:
            tile_i = max(_LANE, ((inner // 2) // _LANE) * _LANE)
    return rows, tile_i, tk


def _gather_along_sublanes(x3, idx3, budget, vmem_limit):
    outer, a_x, inner = x3.shape
    a_idx = idx3.shape[1]
    xb = x3.dtype.itemsize
    ib = idx3.dtype.itemsize
    rows, tile_i, tk = _choose_axis_tiles(outer, a_x, a_idx, inner, xb, ib, budget)
    n_k = _cdiv(a_x, tk)
    grid = (_cdiv(outer, rows), _cdiv(inner, tile_i), n_k)

    cost = pl.CostEstimate(
        flops=2 * outer * a_idx * inner * a_x,
        transcendentals=0,
        bytes_accessed=(x3.size * xb + idx3.size * ib * n_k
                        + outer * a_idx * inner * xb),
    )
    return pl.pallas_call(
        _make_axis_kernel(a_x),
        out_shape=jax.ShapeDtypeStruct((outer, a_idx, inner), x3.dtype),
        grid=grid,
        in_specs=[
            pl.BlockSpec((rows, tk, tile_i), lambda o, t, k: (o, k, t)),
            pl.BlockSpec((rows, a_idx, tile_i), lambda o, t, k: (o, 0, t)),
        ],
        out_specs=pl.BlockSpec((rows, a_idx, tile_i), lambda o, t, k: (o, 0, t)),
        compiler_params=pltpu.CompilerParams(
            dimension_semantics=("parallel", "parallel", "arbitrary"),
            vmem_limit_bytes=vmem_limit,
        ),
        cost_estimate=cost,
    )(x3, idx3)


# --------------------------------------------------------------------------
# Gather along the lane (last) axis: out[r, a] = x[r, idx[r, a]].
# Used for last-axis gathers with a small source extent (no transpose needed).
# --------------------------------------------------------------------------
def _lane_gather_kernel(x_ref, idx_ref, o_ref):
    rows, a_x = x_ref.shape          # a_x == full source extent (<= 32)
    tile_a = idx_ref.shape[1]
    lane_strip = min(tile_a, _LANE * max(1, _STRIP_VREGS // 2))
    n_full = tile_a // lane_strip
    rem = tile_a - n_full * lane_strip

    def scan_strip(r0, rsz, lane0, width):
        idx = idx_ref[pl.ds(r0, rsz), lane0:lane0 + width].astype(jnp.int32)
        idx = jnp.clip(idx, 0, a_x - 1)
        acc = jnp.broadcast_to(x_ref[pl.ds(r0, rsz), 0:1], (rsz, width))
        for k in range(1, a_x):
            col = x_ref[pl.ds(r0, rsz), k:k + 1]      # (rsz, 1) lane column
            acc = jnp.where(idx == k, col, acc)
        o_ref[pl.ds(r0, rsz), lane0:lane0 + width] = acc

    def do_rows(r0, rsz):
        for s in range(n_full):
            scan_strip(r0, rsz, s * lane_strip, lane_strip)
        if rem:
            scan_strip(r0, rsz, n_full * lane_strip, rem)

    if rows > _SUBLANE and rows % _SUBLANE == 0:
        @pl.loop(0, rows // _SUBLANE)
        def _(g):
            do_rows(pl.multiple_of(g * _SUBLANE, _SUBLANE), _SUBLANE)
    else:
        do_rows(0, rows)


def _choose_lane_tiles(outer, a_x, a_idx, x_bytes, idx_bytes, budget):
    x_row_bytes = _round_up(a_x, _LANE) * x_bytes
    io_bytes = idx_bytes + x_bytes
    # Cap the lane tile so an 8-row strip fits the budget and the static
    # in-kernel strip unrolling stays small.
    max_tile_a = min(8 * 1024, max(_LANE, budget // (_SUBLANE * io_bytes)))
    tile_a = a_idx if a_idx <= max_tile_a else max(_LANE, (max_tile_a // _LANE) * _LANE)
    row_bytes = x_row_bytes + _round_up(tile_a, _LANE) * io_bytes
    rows = int(max(1, min(outer, budget // row_bytes)))
    if outer <= _SUBLANE:
        rows = outer                      # full (sub-8) sublane extent
    elif rows < _SUBLANE:
        rows = _SUBLANE
    else:
        rows = (rows // _SUBLANE) * _SUBLANE
    # Guarantee >= 2 blocks on a "parallel" grid axis (v7x: 2 TensorCores).
    if _cdiv(outer, rows) * _cdiv(a_idx, tile_a) < 2:
        if outer > _SUBLANE:
            rows = max(_SUBLANE, ((outer // 2) // _SUBLANE) * _SUBLANE)
        elif a_idx > _LANE:
            tile_a = max(_LANE, ((a_idx // 2) // _LANE) * _LANE)
    return rows, tile_a


def _gather_along_lanes(x2, idx2, budget, vmem_limit):
    outer, a_x = x2.shape
    a_idx = idx2.shape[1]
    xb = x2.dtype.itemsize
    ib = idx2.dtype.itemsize
    rows, tile_a = _choose_lane_tiles(outer, a_x, a_idx, xb, ib, budget)
    grid = (_cdiv(outer, rows), _cdiv(a_idx, tile_a))
    cost = pl.CostEstimate(
        flops=2 * outer * a_idx * a_x,
        transcendentals=0,
        bytes_accessed=x2.size * xb + idx2.size * ib + outer * a_idx * xb,
    )
    return pl.pallas_call(
        _lane_gather_kernel,
        out_shape=jax.ShapeDtypeStruct((outer, a_idx), x2.dtype),
        grid=grid,
        in_specs=[
            pl.BlockSpec((rows, a_x), lambda o, t: (o, 0)),
            pl.BlockSpec((rows, tile_a), lambda o, t: (o, t)),
        ],
        out_specs=pl.BlockSpec((rows, tile_a), lambda o, t: (o, t)),
        compiler_params=pltpu.CompilerParams(
            dimension_semantics=("parallel", "parallel"),
            vmem_limit_bytes=vmem_limit,
        ),
        cost_estimate=cost,
    )(x2, idx2)


# --------------------------------------------------------------------------
# Public wrapper: torch.gather(x, axis, index) / ONNX GatherElements.
# --------------------------------------------------------------------------
def gather_elements(x, index, axis, *, block_budget_bytes=None):
    ndim = x.ndim
    axis = axis % ndim

    # torch.gather allows index to be smaller than x on non-gather dims; only
    # the leading sub-block of x participates.
    if any(index.shape[d] != x.shape[d] for d in range(ndim) if d != axis):
        limits = tuple(x.shape[d] if d == axis else index.shape[d]
                       for d in range(ndim))
        x = lax.slice(x, (0,) * ndim, limits)

    a_x = x.shape[axis]
    a_idx = index.shape[axis]
    outer = math.prod(index.shape[:axis])
    inner = math.prod(index.shape[axis + 1:])

    budget, vmem_limit = _tpu_budgets()
    if block_budget_bytes is not None:
        budget = int(block_budget_bytes)

    # Keep already-narrow index dtypes (they are upcast once in-kernel);
    # truncate wider / unsigned ints to int32.
    # TODO(synk): invalid (out-of-range) indices are clamped instead of raising
    # like torch.gather; int64 indices are truncated to int32.
    if index.dtype not in (jnp.int8, jnp.int16, jnp.int32):
        index = index.astype(jnp.int32)

    x3 = x.reshape(outer, a_x, inner)
    idx3 = index.reshape(outer, a_idx, inner)

    # Last-axis gather with a small source extent: gather along lanes, no
    # wrapper-side transpose.
    if (inner == 1 and a_x <= _LANE_GATHER_MAX_AX
            and (a_idx >= _LANE or a_idx >= outer)):
        out2 = _gather_along_lanes(x3.reshape(outer, a_x),
                                   idx3.reshape(outer, a_idx),
                                   budget, vmem_limit)
        return out2.reshape(index.shape)

    # Narrow trailing dims: swap outer<->inner so a wide dim lands on lanes.
    swapped = inner < _LANE and outer > inner
    if swapped:
        # The transpose materializes index anyway -> fold in int16 narrowing
        # (halves the index HBM / VMEM stream for the kernel).
        if idx3.dtype == jnp.int32 and a_x <= jnp.iinfo(jnp.int16).max:
            idx3 = idx3.astype(jnp.int16)
        x3 = jnp.swapaxes(x3, 0, 2)
        idx3 = jnp.swapaxes(idx3, 0, 2)
        outer, inner = inner, outer

    out3 = _gather_along_sublanes(x3, idx3, budget, vmem_limit)
    if swapped:
        out3 = jnp.swapaxes(out3, 0, 2)
    return out3.reshape(index.shape)


if __name__ == "__main__":
    key = jax.random.PRNGKey(0)
    ks = jax.random.split(key, 10)

    # 1) NCHW-style gather along channels: small source axis -> unrolled scan.
    x1 = jax.random.normal(ks[0], (2, 4, 16, 16), dtype=jnp.float32)
    i1 = jax.random.randint(ks[1], (2, 3, 16, 16), 0, 4, dtype=jnp.int32)
    o1 = jax.block_until_ready(gather_elements(x1, i1, 1))
    assert o1.shape == i1.shape and o1.dtype == x1.dtype
    assert jnp.array_equal(o1, jnp.take_along_axis(x1, i1, axis=1)), "test 1"

    # 2) Longer source axis -> fori_loop(unroll=8) scan path.
    x2 = jax.random.normal(ks[2], (2, 40, 8, 24), dtype=jnp.float32)
    i2 = jax.random.randint(ks[3], (2, 24, 8, 24), 0, 40, dtype=jnp.int32)
    o2 = jax.block_until_ready(gather_elements(x2, i2, 1))
    assert jnp.array_equal(o2, jnp.take_along_axis(x2, i2, axis=1)), "test 2"

    # 3) Tiny block budget -> multi-step grid with source-axis (k) tiling and a
    #    partial lane tile; exercises the resident-output accumulator path.
    x3 = jax.random.normal(ks[4], (2, 20, 8, 24), dtype=jnp.float32)
    i3 = jax.random.randint(ks[5], (2, 12, 8, 24), 0, 20, dtype=jnp.int32)
    o3 = jax.block_until_ready(
        gather_elements(x3, i3, 1, block_budget_bytes=16 * 1024))
    assert jnp.array_equal(o3, jnp.take_along_axis(x3, i3, axis=1)), "test 3"

    # 4) Last-axis gather, narrow index extent -> swapped (lane-dense via
    #    transpose) path with int16-narrowed indices.
    x4 = jax.random.normal(ks[6], (2, 4, 16, 16), dtype=jnp.float32)
    i4 = jax.random.randint(ks[7], (2, 4, 16, 10), 0, 16, dtype=jnp.int32)
    o4 = jax.block_until_ready(gather_elements(x4, i4, -1))
    assert jnp.array_equal(o4, jnp.take_along_axis(x4, i4, axis=-1)), "test 4"

    # 5) Last-axis gather, wide index extent -> transpose-free lane-gather path.
    x5 = jax.random.normal(ks[8], (4, 8, 32), dtype=jnp.float32)
    i5 = jax.random.randint(ks[9], (4, 8, 160), 0, 32, dtype=jnp.int32)
    o5 = jax.block_until_ready(gather_elements(x5, i5, -1))
    assert jnp.array_equal(o5, jnp.take_along_axis(x5, i5, axis=-1)), "test 5"

    print("KERNEL_OK")
</pallas_src>

<mosaic_0001>
module attributes {stable_mosaic.version = 11 : i64} {
  func.func @kernel(%arg0: i32, %arg1: i32, %arg2: i32, %arg3: memref<1x4x256xf32, #tpu.memory_space<vmem>>, %arg4: memref<1x3x256xi32, #tpu.memory_space<vmem>>, %arg5: memref<1x3x256xf32, #tpu.memory_space<vmem>>) attributes {dimension_semantics = [#tpu.dimension_semantics<parallel>, #tpu.dimension_semantics<parallel>, #tpu.dimension_semantics<arbitrary>], iteration_bounds = array<i64: 2, 1, 1>, scalar_prefetch = 0 : i64, scratch_operands = 0 : i64, tpu.core_type = #tpu.core_type<tc>, window_params = [{transform_indices = @transform_0, window_bounds = array<i64: 1, 4, 256>}, {transform_indices = @transform_1, window_bounds = array<i64: 1, 3, 256>}, {transform_indices = @transform_2, window_bounds = array<i64: 1, 3, 256>}]} {
    %c4_i32 = arith.constant 4 : i32
    %0 = arith.muli %arg2, %c4_i32 : i32
    %c0_i32 = arith.constant 0 : i32
    %c1_i32 = arith.constant 1 : i32
    %1 = arith.muli %c0_i32, %c1_i32 : i32
    %c0_i32_0 = arith.constant 0 : i32
    %2 = arith.addi %c0_i32_0, %1 : i32
    %3 = arith.index_cast %2 : i32 to index
    %c0 = arith.constant 0 : index
    %c0_1 = arith.constant 0 : index
    %4 = vector.load %arg4[%3, %c0, %c0_1] : memref<1x3x256xi32, #tpu.memory_space<vmem>>, vector<1x3x256xi32>
    %c0_i32_2 = arith.constant 0 : i32
    %c3_i32 = arith.constant 3 : i32
    %5 = vector.broadcast %c0_i32_2 : i32 to vector<1x3x256xi32>
    %6 = arith.maxsi %5, %4 : vector<1x3x256xi32>
    %7 = vector.broadcast %c3_i32 : i32 to vector<1x3x256xi32>
    %8 = arith.minsi %7, %6 : vector<1x3x256xi32>
    %9 = arith.index_cast %2 : i32 to index
    %c0_3 = arith.constant 0 : index
    %c0_4 = arith.constant 0 : index
    %10 = vector.load %arg5[%9, %c0_3, %c0_4] : memref<1x3x256xf32, #tpu.memory_space<vmem>>, vector<1x3x256xf32>
    %11 = arith.index_cast %2 : i32 to index
    %c0_5 = arith.constant 0 : index
    %c0_6 = arith.constant 0 : index
    %12 = vector.load %arg3[%11, %c0_5, %c0_6] : memref<1x4x256xf32, #tpu.memory_space<vmem>>, vector<1x1x256xf32>
    %c0_i32_7 = arith.constant 0 : i32
    %13 = arith.addi %0, %c0_i32_7 : i32
    %14 = vector.broadcast %13 : i32 to vector<1x3x256xi32>
    %15 = arith.cmpi eq, %8, %14 : vector<1x3x256xi32>
    %16 = vector.shape_cast %12 : vector<1x1x256xf32> to vector<1x1x256xf32>
    %17 = vector.broadcast %16 : vector<1x1x256xf32> to vector<1x3x256xf32>
    %18 = arith.select %15, %17, %10 : vector<1x3x256xi1>, vector<1x3x256xf32>
    %19 = arith.index_cast %2 : i32 to index
    %c1 = arith.constant 1 : index
    %c0_8 = arith.constant 0 : index
    %20 = vector.load %arg3[%19, %c1, %c0_8] : memref<1x4x256xf32, #tpu.memory_space<vmem>>, vector<1x1x256xf32>
    %c1_i32_9 = arith.constant 1 : i32
    %21 = arith.addi %0, %c1_i32_9 : i32
    %22 = vector.broadcast %21 : i32 to vector<1x3x256xi32>
    %23 = arith.cmpi eq, %8, %22 : vector<1x3x256xi32>
    %24 = vector.shape_cast %20 : vector<1x1x256xf32> to vector<1x1x256xf32>
    %25 = vector.broadcast %24 : vector<1x1x256xf32> to vector<1x3x256xf32>
    %26 = arith.select %23, %25, %18 : vector<1x3x256xi1>, vector<1x3x256xf32>
    %27 = arith.index_cast %2 : i32 to index
    %c2 = arith.constant 2 : index
    %c0_10 = arith.constant 0 : index
    %28 = vector.load %arg3[%27, %c2, %c0_10] : memref<1x4x256xf32, #tpu.memory_space<vmem>>, vector<1x1x256xf32>
    %c2_i32 = arith.constant 2 : i32
    %29 = arith.addi %0, %c2_i32 : i32
    %30 = vector.broadcast %29 : i32 to vector<1x3x256xi32>
    %31 = arith.cmpi eq, %8, %30 : vector<1x3x256xi32>
    %32 = vector.shape_cast %28 : vector<1x1x256xf32> to vector<1x1x256xf32>
    %33 = vector.broadcast %32 : vector<1x1x256xf32> to vector<1x3x256xf32>
    %34 = arith.select %31, %33, %26 : vector<1x3x256xi1>, vector<1x3x256xf32>
    %35 = arith.index_cast %2 : i32 to index
    %c3 = arith.constant 3 : index
    %c0_11 = arith.constant 0 : index
    %36 = vector.load %arg3[%35, %c3, %c0_11] : memref<1x4x256xf32, #tpu.memory_space<vmem>>, vector<1x1x256xf32>
    %c3_i32_12 = arith.constant 3 : i32
    %37 = arith.addi %0, %c3_i32_12 : i32
    %38 = vector.broadcast %37 : i32 to vector<1x3x256xi32>
    %39 = arith.cmpi eq, %8, %38 : vector<1x3x256xi32>
    %40 = vector.shape_cast %36 : vector<1x1x256xf32> to vector<1x1x256xf32>
    %41 = vector.broadcast %40 : vector<1x1x256xf32> to vector<1x3x256xf32>
    %42 = arith.select %39, %41, %34 : vector<1x3x256xi1>, vector<1x3x256xf32>
    %43 = arith.index_cast %2 : i32 to index
    %c0_13 = arith.constant 0 : index
    %c0_14 = arith.constant 0 : index
    %44 = vector.load %arg5[%43, %c0_13, %c0_14] : memref<1x3x256xf32, #tpu.memory_space<vmem>>, vector<1x3x256xf32>
    tpu.vector_store %arg5[%43, %c0_13, %c0_14], %42 {strides = array<i32>} : memref<1x3x256xf32, #tpu.memory_space<vmem>>, vector<1x3x256xf32>,
    %c1_i32_15 = arith.constant 1 : i32
    return
  }
  func.func @transform_0(%arg0: i32, %arg1: i32, %arg2: i32) -> (i32, i32, i32) {
    %c0_i32 = arith.constant 0 : i32
    return %arg0, %arg2, %arg1 : i32, i32, i32
  }
  func.func @transform_1(%arg0: i32, %arg1: i32, %arg2: i32) -> (i32, i32, i32) {
    %c0_i32 = arith.constant 0 : i32
    %c0_i32_0 = arith.constant 0 : i32
    return %arg0, %c0_i32, %arg1 : i32, i32, i32
  }
  func.func @transform_2(%arg0: i32, %arg1: i32, %arg2: i32) -> (i32, i32, i32) {
    %c0_i32 = arith.constant 0 : i32
    %c0_i32_0 = arith.constant 0 : i32
    return %arg0, %c0_i32, %arg1 : i32, i32, i32
  }
}

</mosaic_0001>

<llo_original>
// kernel: tpu_custom_call.1
$region0: #{tpu_custom_call.1}
  #allocation0 [shape = 'u32[]', space=smem, size = 0x4, offset = 0x4, fixed_abs, tag = 'smem constant byte address 0x4 - core index']
  #allocation1 [shape = 'u32[72,128]{1,0:T(1,128)}', space=vmem, size = 0x9000, scoped, tag = 'internal scratch']
  %s0 = inlined_call_operand.vmem [shape: f32[2,4,256], index: 0, kind: input, shape index: {}]
  %s1 = inlined_call_operand.vmem [shape: s32[2,3,256], index: 1, kind: input, shape index: {}]
  %s2 = inlined_call_operand.vmem [shape: f32[2,3,256], index: 2, kind: output, shape index: {}]
  %s3 = sld [smem:[#allocation0]]
  $region41: #{tpu_custom_call.1} parent=0
    _
  %s5 = ssub.s32 1, %s3
  %s6 = scalar_select 0, %s5, %s3
  loop: start=0, step=1, limit=4
  $region2: #{tpu_custom_call.1} parent=0 // loop_pre_header
    _
  $region3: #{tpu_custom_call.1} parent=0 // loop_header
    %s8 = sphi 0, %s12
    %p9 = scmp.ge.s32.totalorder %s8, 4
    %s15 = sphi 0, %s34
    %s16 = sphi 0, %s30
    %s17 = sphi 0, %s26
    %s18 = sphi 0, %s15
    %s19 = sphi 0, %s16
    %s20 = sphi 0, %s17
    %s21 = sphi 0, %s18
    %s22 = sphi 0, %s19
    %s23 = sphi 0, %s20
    %s41 = sphi 0, %s43
    %s44 = sphi 0, %s41
    %s45 = sphi 0, %s44
    %s61 = sphi 0, %s45
    %s69 = sphi 0, %s71
    %s72 = sphi 0, %s69
    %s73 = sphi 0, %s72
    %s89 = sphi 0, %s73
    %s97 = sphi 0, %s99
    %s100 = sphi 0, %s97
    %s101 = sphi 0, %s100
    %s117 = sphi 0, %s101
  $region4: #{tpu_custom_call.1} parent=0 // loop_header_branch
    %11 = sbr.rel (%p9) target = $region8
  $region5: #{tpu_custom_call.1} parent=0 // loop_body
    %s13 = ssub.s32 %s8, 1
    %s14 = ssub.s32 %s8, 2
    %s24 = sadd.s32 1, %s17
    %p25 = scmp.ge.s32.totalorder %s24, 1
    %s26 = scalar_select %p25, 0, %s24
    %s27 = sadd.s32 1, %s16
    %s28 = scalar_select %p25, %s27, %s16
    %p29 = scmp.ge.s32.totalorder %s28, 1
    %s30 = scalar_select %p29, 0, %s28
    %s31 = sadd.s32 1, %s15
    %s32 = scalar_select %p29, %s31, %s15
    %p33 = scmp.ge.s32.totalorder %s32, 2
    %s34 = scalar_select %p33, 0, %s32
    %s35 = ssub.s32 %s15, %s34
    %s36 = ssub.s32 %s17, %s26
    %s37 = sor.u32 %s35, %s36
    %s38 = ssub.s32 %s16, %s30
    %s39 = sor.u32 %s37, %s38
    %p40 = scmp.eq.s32.totalorder %s39, 0
    %s42 = sadd.s32 %s41, 1
    %s43 = scalar_select %p40, %s41, %s42
    %p46 = pneg %p40
    %p47 = scmp.eq.s32.totalorder %s8, 1
    %p48 = por %p46, %p47
    %p49 = scmp.ne.s32.totalorder %s41, %s44
    %p50 = scmp.eq.s32.totalorder %s8, 0
    %p51 = por %p49, %p50
    %p52 = scmp.ne.s32.totalorder %s41, %s44
    %p53 = scmp.eq.s32.totalorder %s13, 1
    %p54 = por %p52, %p53
    %p55 = scmp.ne.s32.totalorder %s44, %s45
    %p56 = scmp.eq.s32.totalorder %s13, 0
    %p57 = por %p55, %p56
    %p58 = scmp.ne.s32.totalorder %s44, %s45
    %p59 = scmp.eq.s32.totalorder %s14, 1
    %p60 = por %p58, %p59
    %p62 = scmp.ne.s32.totalorder %s45, %s61
    %p63 = scmp.eq.s32.totalorder %s14, 0
    %p64 = por %p62, %p63
    %s65 = ssub.s32 %s15, %s34
    %s66 = ssub.s32 %s16, %s30
    %s67 = sor.u32 %s65, %s66
    %p68 = scmp.eq.s32.totalorder %s67, 0
    %s70 = sadd.s32 %s69, 1
    %s71 = scalar_select %p68, %s69, %s70
    %p74 = pneg %p68
    %p75 = scmp.eq.s32.totalorder %s8, 1
    %p76 = por %p74, %p75
    %p77 = scmp.ne.s32.totalorder %s69, %s72
    %p78 = scmp.eq.s32.totalorder %s8, 0
    %p79 = por %p77, %p78
    %p80 = scmp.ne.s32.totalorder %s69, %s72
    %p81 = scmp.eq.s32.totalorder %s13, 1
    %p82 = por %p80, %p81
    %p83 = scmp.ne.s32.totalorder %s72, %s73
    %p84 = scmp.eq.s32.totalorder %s13, 0
    %p85 = por %p83, %p84
    %p86 = scmp.ne.s32.totalorder %s72, %s73
    %p87 = scmp.eq.s32.totalorder %s14, 1
    %p88 = por %p86, %p87
    %p90 = scmp.ne.s32.totalorder %s73, %s89
    %p91 = scmp.eq.s32.totalorder %s14, 0
    %p92 = por %p90, %p91
    %s93 = ssub.s32 %s15, %s34
    %s94 = ssub.s32 %s16, %s30
    %s95 = sor.u32 %s93, %s94
    %p96 = scmp.eq.s32.totalorder %s95, 0
    %s98 = sadd.s32 %s97, 1
    %s99 = scalar_select %p96, %s97, %s98
    %p102 = pneg %p96
    %p103 = scmp.eq.s32.totalorder %s8, 1
    %p104 = por %p102, %p103
    %p105 = scmp.ne.s32.totalorder %s97, %s100
    %p106 = scmp.eq.s32.totalorder %s8, 0
    %p107 = por %p105, %p106
    %p108 = scmp.ne.s32.totalorder %s97, %s100
    %p109 = scmp.eq.s32.totalorder %s13, 1
    %p110 = por %p108, %p109
    %p111 = scmp.ne.s32.totalorder %s100, %s101
    %p112 = scmp.eq.s32.totalorder %s13, 0
    %p113 = por %p111, %p112
    %p114 = scmp.ne.s32.totalorder %s100, %s101
    %p115 = scmp.eq.s32.totalorder %s14, 1
    %p116 = por %p114, %p115
    %p118 = scmp.ne.s32.totalorder %s101, %s117
    %p119 = scmp.eq.s32.totalorder %s14, 0
    %p120 = por %p118, %p119
    %p121 = scmp.le.s32.totalorder 1, %s8
    %p122 = scmp.lt.s32.totalorder %s8, 3
    %p123 = pnand %p121, %p122
    %p124 = pneg %p123
    // Predicated region
    $region9: #{tpu_custom_call.1} parent=5 // pred_check
      _
    $region10: #{tpu_custom_call.1} parent=5 // pred_check_branch
      %126 = sbr.rel (%p123) target = $region12
    $region11: #{tpu_custom_call.1} parent=5 // pred_region
      %s127 = ssub.s32 %s8, 1
    $region12: #{tpu_custom_call.1} parent=5 // pred_fallthru
      _
    %p128 = scmp.lt.s32.totalorder %s8, 2
    // Predicated region
    $region13: #{tpu_custom_call.1} parent=5 // pred_check
      %p129 = pneg %p128
    $region14: #{tpu_custom_call.1} parent=5 // pred_check_branch
      %131 = sbr.rel (%p129) target = $region16
    $region15: #{tpu_custom_call.1} parent=5 // pred_region
      // Predicated region
      $region17: #{tpu_custom_call.1} parent=15 // pred_check
        %p132 = pneg %p51
      $region18: #{tpu_custom_call.1} parent=15 // pred_check_branch
        %134 = sbr.rel (%p132) target = $region20
      $region19: #{tpu_custom_call.1} parent=15 // pred_region
        %s135 = smul.u32 2, %s16
        %p136 = scmp.lt.s32.totalorder %s15, 1
        %s137 = scalar_select %p136, %s15, 1
        %p138 = scmp.lt.s32.totalorder %s17, 0
        %s139 = scalar_select %p138, %s17, 0
        %p140 = scmp.lt.s32.totalorder %s135, 1
        %s141 = scalar_select %p140, %s135, 1
        %s142 = smul.addr %s139, 2
        %s143 = sadd.s32 %s141, %s142
        %s144 = smul.addr %s137, 2
        %s145 = sadd.s32 %s143, %s144
        %s146 = smul.addr %s145, 4
        %s147 = scalar_lea.vmem %s0, %s146
        %s148 = smul.u32 2, %s16
      $region20: #{tpu_custom_call.1} parent=15 // pred_fallthru
        _
      // Predicated region
      $region21: #{tpu_custom_call.1} parent=15 // pred_check
        %p149 = pneg %p79
      $region22: #{tpu_custom_call.1} parent=15 // pred_check_branch
        %151 = sbr.rel (%p149) target = $region24
      $region23: #{tpu_custom_call.1} parent=15 // pred_region
        %s152 = smul.u32 2, %s16
        %p153 = scmp.lt.s32.totalorder %s15, 1
        %s154 = scalar_select %p153, %s15, 1
        %p155 = scmp.lt.s32.totalorder %s152, 1
        %s156 = scalar_select %p155, %s152, 1
        %s157 = smul.addr %s154, 2
        %s158 = sadd.s32 %s156, %s157
        %s159 = smul.addr %s158, 4
        %s160 = scalar_lea.vmem %s1, %s159
        %s161 = smul.u32 2, %s16
      $region24: #{tpu_custom_call.1} parent=15 // pred_fallthru
        _
    $region16: #{tpu_custom_call.1} parent=5 // pred_fallthru
      _
    %p162 = scmp.le.s32.totalorder 1, %s8
    %p163 = scmp.lt.s32.totalorder %s8, 3
    %p164 = pnand %p162, %p163
    %p165 = pneg %p164
    // Predicated region
    $region25: #{tpu_custom_call.1} parent=5 // pred_check
      _
    $region26: #{tpu_custom_call.1} parent=5 // pred_check_branch
      %167 = sbr.rel (%p164) target = $region28
    $region27: #{tpu_custom_call.1} parent=5 // pred_region
      %s168 = ssub.s32 %s8, 1
      %s169 = smul.u32 2, %s19
      %p170 = scmp.lt.s32.totalorder %s18, 1
      %s171 = scalar_select %p170, %s18, 1
      %p172 = scmp.lt.s32.totalorder %s20, 0
      %s173 = scalar_select %p172, %s20, 0
      %p174 = scmp.lt.s32.totalorder %s169, 1
      %s175 = scalar_select %p174, %s169, 1
      %s176 = smul.addr %s173, 2
      %s177 = sadd.s32 %s175, %s176
      %s178 = smul.addr %s171, 2
      %s179 = sadd.s32 %s177, %s178
      %s180 = smul.addr %s179, 4
      %s181 = scalar_lea.vmem %s0, %s180
      %p182 = pneg %p57
      %p183 = pneg %p54
      %s184 = smul.u32 2, %s19
      %p185 = scmp.lt.s32.totalorder %s18, 1
      %s186 = scalar_select %p185, %s18, 1
      %p187 = scmp.lt.s32.totalorder %s184, 1
      %s188 = scalar_select %p187, %s184, 1
      %s189 = smul.addr %s186, 2
      %s190 = sadd.s32 %s188, %s189
      %s191 = smul.addr %s190, 4
      %s192 = scalar_lea.vmem %s1, %s191
      %p193 = pneg %p85
      %p194 = pneg %p82
      %p195 = pneg %p113
      %p196 = pneg %p110
      %s197 = smul.u32 2, %s19
      %p198 = scmp.lt.s32.totalorder %s18, 1
      %s199 = scalar_select %p198, %s18, 1
      %p200 = scmp.lt.s32.totalorder %s197, 1
      %s201 = scalar_select %p200, %s197, 1
      %s202 = smul.addr %s199, 2
      %s203 = sadd.s32 %s201, %s202
      %s204 = smul.addr %s203, 4
      %s205 = scalar_lea.vmem %s2, %s204
      %s206 = smul.u32 2, %s19
      %p207 = scmp.lt.s32.totalorder %s18, 1
      %s208 = scalar_select %p207, %s18, 1
      %p209 = scmp.lt.s32.totalorder %s20, 0
      %s210 = scalar_select %p209, %s20, 0
      %p211 = scmp.lt.s32.totalorder %s206, 1
      %s212 = scalar_select %p211, %s206, 1
      %s213 = smul.addr %s210, 2
      %s214 = sadd.s32 %s212, %s213
      %s215 = smul.addr %s208, 2
      %s216 = sadd.s32 %s214, %s215
      %s217 = smul.addr %s216, 4
      %s218 = scalar_lea.vmem %s0, %s217
      %s219 = smul.u32 2, %s19
      %s220 = smul.u32 2, %s19
      %p221 = scmp.lt.s32.totalorder %s18, 1
      %s222 = scalar_select %p221, %s18, 1
      %p223 = scmp.lt.s32.totalorder %s220, 1
      %s224 = scalar_select %p223, %s220, 1
      %s225 = smul.addr %s222, 2
      %s226 = sadd.s32 %s224, %s225
      %s227 = smul.addr %s226, 4
      %s228 = scalar_lea.vmem %s1, %s227
      %s229 = smul.u32 2, %s19
      %s230 = smul.u32 2, %s19
      %p231 = scmp.lt.s32.totalorder %s18, 1
      %s232 = scalar_select %p231, %s18, 1
      %p233 = scmp.lt.s32.totalorder %s230, 1
      %s234 = scalar_select %p233, %s230, 1
      %s235 = smul.addr %s232, 2
      %s236 = sadd.s32 %s234, %s235
      %s237 = smul.addr %s236, 4
      %s238 = scalar_lea.vmem %s2, %s237
      %s239 = smul.u32 2, %s19
      %s240 = smul.u32 %s20, 4
      %v241 = vld [vmem:[%s228] sm:$0x77]
      %vm242 = vcmp.gt.s32.totalorder %v241, 0
      %v243 = vsel %vm242, %v241, 0
      %vm244 = vcmp.lt.s32.totalorder %v243, 3
      %v245 = vsel %vm244, %v243, 3
      %v246 = vld [vmem:[%s238] sm:$0x77]
      %v247 = vld [vmem:[%s218] ss:$4 sm:$0x3]
      %v248 = vstv %s240
      %vm249 = vcmp.eq.s32.totalorder %v245, %v248
      %v251 = vperm.slane %v247, 0
      %v252 = vperm.slane %v247, 1
      %v253 = vrot.slane %v252, 4
      %vm254 = vcmask 1043456
      %v255 = vsel %vm254, %v251, %v253
      %v257 = vsel %vm249, %v255, %v246
      %s258 = scalar_lea.vmem %s218, 1
      %v259 = vld [vmem:[%s258] ss:$4 sm:$0x3]
      %s260 = sadd.s32 %s240, 1
      %v261 = vstv %s260
      %vm262 = vcmp.eq.s32.totalorder %v245, %v261
      %v264 = vperm.slane %v259, 0
      %v265 = vperm.slane %v259, 1
      %v266 = vrot.slane %v265, 4
      %v267 = vsel %vm254, %v264, %v266
      %v269 = vsel %vm262, %v267, %v257
      %s270 = scalar_lea.vmem %s218, 2
      %v271 = vld [vmem:[%s270] ss:$4 sm:$0x3]
      %s272 = sadd.s32 %s240, 2
      %v273 = vstv %s272
      %vm274 = vcmp.eq.s32.totalorder %v245, %v273
      %v276 = vperm.slane %v271, 0
      %v277 = vperm.slane %v271, 1
      %v278 = vrot.slane %v277, 4
      %v279 = vsel %vm254, %v276, %v278
      %v281 = vsel %vm274, %v279, %v269
      %s282 = scalar_lea.vmem %s218, 3
      %v283 = vld [vmem:[%s282] ss:$4 sm:$0x3]
      %s284 = sadd.s32 %s240, 3
      %v285 = vstv %s284
      %vm286 = vcmp.eq.s32.totalorder %v245, %v285
      %v288 = vperm.slane %v283, 0
      %v289 = vperm.slane %v283, 1
      %v290 = vrot.slane %v289, 4
      %v291 = vsel %vm254, %v288, %v290
      %v293 = vsel %vm286, %v291, %v281
      %294 = vst [vmem:[%s238] sm:$0x77] %v293
      %s295 = smul.u32 2, %s19
      %p296 = scmp.lt.s32.totalorder %s18, 1
      %s297 = scalar_select %p296, %s18, 1
      %p298 = scmp.lt.s32.totalorder %s295, 1
      %s299 = scalar_select %p298, %s295, 1
      %s300 = smul.addr %s297, 2
      %s301 = sadd.s32 %s299, %s300
      %s302 = smul.addr %s301, 4
      %s303 = scalar_lea.vmem %s2, %s302
      // Predicated region
      $region29: #{tpu_custom_call.1} parent=27 // pred_check
        %p304 = pneg %p110
      $region30: #{tpu_custom_call.1} parent=27 // pred_check_branch
        %306 = sbr.rel (%p304) target = $region32
      $region31: #{tpu_custom_call.1} parent=27 // pred_region
        %s307 = smul.u32 2, %s19
      $region32: #{tpu_custom_call.1} parent=27 // pred_fallthru
        _
    $region28: #{tpu_custom_call.1} parent=5 // pred_fallthru
      _
    %p308 = scmp.le.s32.totalorder 2, %s8
    // Predicated region
    $region33: #{tpu_custom_call.1} parent=5 // pred_check
      %p309 = pneg %p308
    $region34: #{tpu_custom_call.1} parent=5 // pred_check_branch
      %311 = sbr.rel (%p309) target = $region36
    $region35: #{tpu_custom_call.1} parent=5 // pred_region
      %s312 = ssub.s32 %s8, 2
      // Predicated region
      $region37: #{tpu_custom_call.1} parent=35 // pred_check
        %p313 = pneg %p116
      $region38: #{tpu_custom_call.1} parent=35 // pred_check_branch
        %315 = sbr.rel (%p313) target = $region40
      $region39: #{tpu_custom_call.1} parent=35 // pred_region
        %s316 = smul.u32 2, %s22
        %p317 = scmp.lt.s32.totalorder %s21, 1
        %s318 = scalar_select %p317, %s21, 1
        %p319 = scmp.lt.s32.totalorder %s316, 1
        %s320 = scalar_select %p319, %s316, 1
        %s321 = smul.addr %s318, 2
        %s322 = sadd.s32 %s320, %s321
        %s323 = smul.addr %s322, 4
        %s324 = scalar_lea.vmem %s2, %s323
      $region40: #{tpu_custom_call.1} parent=35 // pred_fallthru
        _
    $region36: #{tpu_custom_call.1} parent=5 // pred_fallthru
      _
  $region6: #{tpu_custom_call.1} parent=0 // loop_footer
    %s12 = sadd.s32 1, %s8
  $region7: #{tpu_custom_call.1} parent=0 // loop_footer_branch
    %7 = sbr.rel target = $region3
  $region8: #{tpu_custom_call.1} parent=0 // loop_exit
    _

</llo_original>
